<compile_context>
chip_gen: v6e
topology: v6e:2x2x1
jax: 0.10.0
libtpu: 0.0.40
codegen_flags: <defaults>
</compile_context>

<pallas_src>
import numpy as np
import jax
import jax.numpy as jnp
from jax.experimental import pallas as pl
from jax.experimental.pallas import tpu as pltpu

# ---- small, deterministic problem sizes (module defaults scaled down) ----
B = 2              # batch
CIN = 4            # in_channels
L = 16             # sequence length (divisible by 4: two MaxPool1d(2) stages)
H = 8              # hidden_channels (scaled down from 64)
H2 = 2 * H         # hidden_channels * 2
H4 = 4 * H         # hidden_channels * 4
K = 5              # kernel_size
PAD = K // 2       # Conv1d "same" padding
L1 = L // 2        # length after block1's MaxPool1d(2)
L2 = L1 // 2       # length after block2's MaxPool1d(2)
NCLASS = 3         # num_classes
BN_EPS = 1e-5

# ---- packed-parameter blob layout: one (PROWS, 128) f32 array, lane-padded ----
PROWS = 88
_W1_COL, _W2_COL, _W3_COL, _WSC_COL, _FCW_COL = 0, 8, 24, 56, 88
_T1_ROW, _T2_ROW, _T3_ROW, _TSC_ROW, _FCB_ROW = 80, 81, 82, 83, 84


# ---------------------------------------------------------------------------
# in-kernel helpers (traced, static Python loops over B / K only)
# ---------------------------------------------------------------------------
def _maxpool2_rows(h):
    """MaxPool1d(2) on (B*seq, C) batch-major rows, via one-hot row-selection matmuls.

    Adjacent row pairs never cross a batch boundary (seq is even).  Keeps the pool fully
    register-resident: no scratch store + strided masked reloads.
    """
    n_in = h.shape[0]
    n_out = n_in // 2
    r = jax.lax.broadcasted_iota(jnp.int32, (n_out, n_in), 0)
    c = jax.lax.broadcasted_iota(jnp.int32, (n_out, n_in), 1)
    sel_even = (c == 2 * r).astype(jnp.float32)
    sel_odd = (c == 2 * r + 1).astype(jnp.float32)
    return jnp.maximum(
        jnp.dot(sel_even, h, preferred_element_type=jnp.float32),
        jnp.dot(sel_odd, h, preferred_element_type=jnp.float32))


def _im2col_rows(act, seq_len, cdim):
    """(B*seq_len, cdim) -> (B*seq_len, K*cdim) with per-batch zero 'same' padding, in registers."""
    z = jnp.zeros((PAD, cdim), jnp.float32)
    parts = []
    for b in range(B):
        parts += [z, act[b * seq_len:(b + 1) * seq_len, :], z]
    padded = jnp.concatenate(parts, axis=0)                 # (B*(seq_len+2*PAD), cdim)
    lp = seq_len + 2 * PAD
    taps = []
    for k in range(K):
        taps.append(jnp.concatenate(
            [padded[b * lp + k: b * lp + k + seq_len, :] for b in range(B)], axis=0))
    return jnp.concatenate(taps, axis=1)                    # lane index = k*cdim + c


def _seq_mean_rows(h, seq_len):
    """Per-batch mean over the sequence axis: (B*seq_len, C) -> (B, C), via a segment matmul."""
    n_b = h.shape[0] // seq_len
    r = jax.lax.broadcasted_iota(jnp.int32, (n_b, h.shape[0]), 0)
    c = jax.lax.broadcasted_iota(jnp.int32, (n_b, h.shape[0]), 1)
    seg = jnp.logical_and(c >= r * seq_len, c < (r + 1) * seq_len).astype(jnp.float32)
    return jnp.dot(seg, h, preferred_element_type=jnp.float32) * (1.0 / seq_len)


def _relu(x):
    return jnp.maximum(x, 0.0)


# ---------------------------------------------------------------------------
# kernel
# ---------------------------------------------------------------------------
def deep_cnn_kernel(x_ref, p_ref, out_ref):
    x_im = x_ref[...]            # (B*L, K*CIN)  im2col'd input, built wrapper-side
    prm = p_ref[...]             # (PROWS, 128)  packed, BN-folded parameters

    # unpack parameters (static slices of one resident blob; one DMA for all of them)
    w1 = prm[0:K * CIN, _W1_COL:_W1_COL + H]            # (K*CIN, H)
    w2 = prm[0:K * H, _W2_COL:_W2_COL + H2]             # (K*H,  H2)
    w3 = prm[0:K * H2, _W3_COL:_W3_COL + H4]            # (K*H2, H4)
    wsc = prm[0:CIN, _WSC_COL:_WSC_COL + H4]            # (CIN,  H4)
    fcw = prm[0:H4, _FCW_COL:_FCW_COL + NCLASS]         # (H4,   NCLASS)
    t1 = prm[_T1_ROW:_T1_ROW + 1, 0:H]
    t2 = prm[_T2_ROW:_T2_ROW + 1, 0:H2]
    t3 = prm[_T3_ROW:_T3_ROW + 1, 0:H4]
    tsc = prm[_TSC_ROW:_TSC_ROW + 1, 0:H4]
    fcb = prm[_FCB_ROW:_FCB_ROW + 1, 0:NCLASS]

    # block1: Conv1d(CIN->H, k=5, same) + folded BN + ReLU (one matmul), then MaxPool1d(2)
    h1 = _relu(jnp.dot(x_im, w1, preferred_element_type=jnp.float32) + t1)   # (B*L, H)
    p1 = _maxpool2_rows(h1)                                                  # (B*L1, H)

    # block2: Conv1d(H->2H, k=5, same) + folded BN + ReLU (one matmul), then MaxPool1d(2)
    h2 = _relu(jnp.dot(_im2col_rows(p1, L1, H), w2,
                       preferred_element_type=jnp.float32) + t2)             # (B*L1, H2)
    p2 = _maxpool2_rows(h2)                                                  # (B*L2, H2)

    # block3: Conv1d(2H->4H, k=5, same) + folded BN + ReLU (one matmul), then AdaptiveAvgPool1d(1)
    h3 = _relu(jnp.dot(_im2col_rows(p2, L2, H2), w3,
                       preferred_element_type=jnp.float32) + t3)             # (B*L2, H4)
    g = _seq_mean_rows(h3, L2)                                               # (B, H4)

    # shortcut: Conv1d(CIN->4H, k=1) + AdaptiveAvgPool1d(1)  ==  (mean_L x) @ Wsc + bsc
    xc = x_im[:, PAD * CIN:(PAD + 1) * CIN]            # center im2col tap == the original x
    res = jnp.dot(_seq_mean_rows(xc, L), wsc, preferred_element_type=jnp.float32) + tsc

    # TODO(synk): Dropout(p=0.4) is identity in eval mode; training-mode mask not implemented.
    z = g + res
    out_ref[...] = jnp.dot(z, fcw, preferred_element_type=jnp.float32) + fcb   # (B, NCLASS)


# ---------------------------------------------------------------------------
# wrapper: BN folding, parameter packing, im2col of the input, pallas_call
# ---------------------------------------------------------------------------
def _fold_conv_bn(w, b, gamma, beta, mean, var):
    """Fold conv bias + eval-mode BN into (K*Cin, Cout) weight matrix + (Cout,) shift."""
    s = gamma / jnp.sqrt(var + BN_EPS)                       # (O,)
    w_f = w * s[:, None, None]                               # (O, I, K)
    w_mat = jnp.transpose(w_f, (2, 1, 0)).reshape(w.shape[2] * w.shape[1], w.shape[0])
    t = (b - mean) * s + beta
    return w_mat, t


def pack_params(p):
    w1m, t1 = _fold_conv_bn(p['w1'], p['b1'], p['g1'], p['be1'], p['m1'], p['v1'])
    w2m, t2 = _fold_conv_bn(p['w2'], p['b2'], p['g2'], p['be2'], p['m2'], p['v2'])
    w3m, t3 = _fold_conv_bn(p['w3'], p['b3'], p['g3'], p['be3'], p['m3'], p['v3'])
    wscm = p['wsc'][:, :, 0].T                               # (CIN, H4)
    fcwm = p['fcw'].T                                        # (H4, NCLASS)

    blob = jnp.zeros((PROWS, 128), jnp.float32)
    blob = blob.at[0:K * CIN, _W1_COL:_W1_COL + H].set(w1m)
    blob = blob.at[0:K * H, _W2_COL:_W2_COL + H2].set(w2m)
    blob = blob.at[0:K * H2, _W3_COL:_W3_COL + H4].set(w3m)
    blob = blob.at[0:CIN, _WSC_COL:_WSC_COL + H4].set(wscm)
    blob = blob.at[0:H4, _FCW_COL:_FCW_COL + NCLASS].set(fcwm)
    blob = blob.at[_T1_ROW, 0:H].set(t1)
    blob = blob.at[_T2_ROW, 0:H2].set(t2)
    blob = blob.at[_T3_ROW, 0:H4].set(t3)
    blob = blob.at[_TSC_ROW, 0:H4].set(p['bsc'])
    blob = blob.at[_FCB_ROW, 0:NCLASS].set(p['fcb'])
    return blob


def build_x_im2col(x_ncl):
    """(B, CIN, L) NCL -> (B*L, K*CIN) im2col, channels-last, zero 'same' padding."""
    x_blc = jnp.transpose(x_ncl, (0, 2, 1)).astype(jnp.float32)      # (B, L, CIN)
    xp = jnp.pad(x_blc, ((0, 0), (PAD, PAD), (0, 0)))                # (B, L+2*PAD, CIN)
    cols = jnp.concatenate([xp[:, k:k + L, :] for k in range(K)], axis=-1)
    return cols.reshape(B * L, K * CIN)


def deep_cnn_forward(x_ncl, params):
    x_im = build_x_im2col(x_ncl)
    blob = pack_params(params)
    return pl.pallas_call(
        deep_cnn_kernel,
        out_shape=jax.ShapeDtypeStruct((B, NCLASS), jnp.float32),
        in_specs=[pl.BlockSpec(memory_space=pltpu.MemorySpace.VMEM)] * 2,
        out_specs=pl.BlockSpec(memory_space=pltpu.MemorySpace.VMEM),
    )(x_im, blob)


# ---------------------------------------------------------------------------
# deterministic synthetic parameters (PyTorch layouts) + pure-JAX reference
# ---------------------------------------------------------------------------
def init_params(key):
    ks = iter(jax.random.split(key, 24))

    def nrm(shape, scale=0.1):
        return scale * jax.random.normal(next(ks), shape, jnp.float32)

    def bn(c):
        g = 1.0 + nrm((c,))
        be = nrm((c,))
        m = nrm((c,), 0.05)
        v = jax.random.uniform(next(ks), (c,), jnp.float32, 0.5, 1.5)
        return g, be, m, v

    p = {}
    p['w1'], p['b1'] = nrm((H, CIN, K)), nrm((H,))
    p['g1'], p['be1'], p['m1'], p['v1'] = bn(H)
    p['w2'], p['b2'] = nrm((H2, H, K)), nrm((H2,))
    p['g2'], p['be2'], p['m2'], p['v2'] = bn(H2)
    p['w3'], p['b3'] = nrm((H4, H2, K)), nrm((H4,))
    p['g3'], p['be3'], p['m3'], p['v3'] = bn(H4)
    p['wsc'], p['bsc'] = nrm((H4, CIN, 1)), nrm((H4,))
    p['fcw'], p['fcb'] = nrm((NCLASS, H4)), nrm((NCLASS,))
    return p


def _conv1d_same(x, w, b):                    # x (B, L, I) channels-last; w (O, I, K); b (O,)
    lx = x.shape[1]
    xp = jnp.pad(x, ((0, 0), (PAD, PAD), (0, 0)))
    y = sum(jnp.einsum('bli,oi->blo', xp[:, k:k + lx, :], w[:, :, k]) for k in range(K))
    return y + b


def _bn_eval(x, gamma, beta, mean, var):
    return (x - mean) / jnp.sqrt(var + BN_EPS) * gamma + beta


def _maxpool2_ref(x):
    bx, lx, cx = x.shape
    return jnp.max(x.reshape(bx, lx // 2, 2, cx), axis=2)


def reference_forward(x_ncl, p):
    """Pure-JAX (XLA) reference of DeepCNN.forward in eval mode (dropout = identity)."""
    x = jnp.transpose(x_ncl, (0, 2, 1)).astype(jnp.float32)
    residual = jnp.mean(jnp.einsum('bli,oi->blo', x, p['wsc'][:, :, 0]) + p['bsc'], axis=1)
    h = jnp.maximum(_bn_eval(_conv1d_same(x, p['w1'], p['b1']),
                             p['g1'], p['be1'], p['m1'], p['v1']), 0.0)
    h = _maxpool2_ref(h)
    h = jnp.maximum(_bn_eval(_conv1d_same(h, p['w2'], p['b2']),
                             p['g2'], p['be2'], p['m2'], p['v2']), 0.0)
    h = _maxpool2_ref(h)
    h = jnp.maximum(_bn_eval(_conv1d_same(h, p['w3'], p['b3']),
                             p['g3'], p['be3'], p['m3'], p['v3']), 0.0)
    feat = jnp.mean(h, axis=1)
    z = feat + residual
    return z @ p['fcw'].T + p['fcb']


if __name__ == "__main__":
    key = jax.random.PRNGKey(0)
    kx, kp = jax.random.split(key)
    x = jax.random.normal(kx, (B, CIN, L), jnp.float32)   # PyTorch NCL input: (batch, in_channels, seq)
    params = init_params(kp)

    out = deep_cnn_forward(x, params)
    out = jax.block_until_ready(out)

    ref = reference_forward(x, params)
    assert out.shape == (B, NCLASS)
    np.testing.assert_allclose(np.asarray(out), np.asarray(ref), rtol=2e-3, atol=2e-3)
    print("KERNEL_OK")
</pallas_src>

<mosaic_0001>
module attributes {stable_mosaic.version = 11 : i64} {
  func.func @deep_cnn_kernel(%arg0: memref<32x20xf32, #tpu.memory_space<vmem>>, %arg1: memref<88x128xf32, #tpu.memory_space<vmem>>, %arg2: memref<2x3xf32, #tpu.memory_space<vmem>>) attributes {dimension_semantics = [], scalar_prefetch = 0 : i64, scratch_operands = 0 : i64, tpu.core_type = #tpu.core_type<tc>} {
    %c0 = arith.constant 0 : index
    %c0_0 = arith.constant 0 : index
    %0 = vector.load %arg0[%c0, %c0_0] : memref<32x20xf32, #tpu.memory_space<vmem>>, vector<32x20xf32>
    %c0_1 = arith.constant 0 : index
    %c0_2 = arith.constant 0 : index
    %1 = vector.load %arg1[%c0_1, %c0_2] : memref<88x128xf32, #tpu.memory_space<vmem>>, vector<88x128xf32>
    %2 = vector.extract_strided_slice %1 {offsets = [0, 0], sizes = [20, 8], strides = [1, 1]} : vector<88x128xf32> to vector<20x8xf32>
    %3 = vector.extract_strided_slice %1 {offsets = [0, 8], sizes = [40, 16], strides = [1, 1]} : vector<88x128xf32> to vector<40x16xf32>
    %4 = vector.extract_strided_slice %1 {offsets = [0, 24], sizes = [80, 32], strides = [1, 1]} : vector<88x128xf32> to vector<80x32xf32>
    %5 = vector.extract_strided_slice %1 {offsets = [0, 56], sizes = [4, 32], strides = [1, 1]} : vector<88x128xf32> to vector<4x32xf32>
    %6 = vector.extract_strided_slice %1 {offsets = [0, 88], sizes = [32, 3], strides = [1, 1]} : vector<88x128xf32> to vector<32x3xf32>
    %7 = vector.extract_strided_slice %1 {offsets = [80, 0], sizes = [1, 8], strides = [1, 1]} : vector<88x128xf32> to vector<1x8xf32>
    %8 = vector.extract_strided_slice %1 {offsets = [81, 0], sizes = [1, 16], strides = [1, 1]} : vector<88x128xf32> to vector<1x16xf32>
    %9 = vector.extract_strided_slice %1 {offsets = [82, 0], sizes = [1, 32], strides = [1, 1]} : vector<88x128xf32> to vector<1x32xf32>
    %10 = vector.extract_strided_slice %1 {offsets = [83, 0], sizes = [1, 32], strides = [1, 1]} : vector<88x128xf32> to vector<1x32xf32>
    %11 = vector.extract_strided_slice %1 {offsets = [84, 0], sizes = [1, 3], strides = [1, 1]} : vector<88x128xf32> to vector<1x3xf32>
    %cst = arith.constant dense<0.000000e+00> : vector<32x8xf32>
    %12 = tpu.matmul %0, %2, %cst {dimension_numbers = #tpu.dot_dimension_numbers<[1], [0], [0], [1], [0, 0, 1, 1], [], []>} : vector<32x20xf32>, vector<20x8xf32>, vector<32x8xf32> -> vector<32x8xf32>
    %13 = vector.broadcast %7 : vector<1x8xf32> to vector<32x8xf32>
    %14 = arith.addf %12, %13 : vector<32x8xf32>
    %cst_3 = arith.constant 0.000000e+00 : f32
    %15 = vector.broadcast %cst_3 : f32 to vector<32x8xf32>
    %16 = arith.maximumf %14, %15 : vector<32x8xf32>
    %17 = tpu.iota {dimensions = array<i32: 0>} : vector<16x32xi32>
    %18 = tpu.iota {dimensions = array<i32: 1>} : vector<16x32xi32>
    %c2_i32 = arith.constant 2 : i32
    %19 = vector.broadcast %c2_i32 : i32 to vector<16x32xi32>
    %20 = arith.muli %19, %17 : vector<16x32xi32>
    %21 = arith.cmpi eq, %18, %20 : vector<16x32xi32>
    %22 = arith.extui %21 : vector<16x32xi1> to vector<16x32xi32>
    %23 = arith.sitofp %22 : vector<16x32xi32> to vector<16x32xf32>
    %c2_i32_4 = arith.constant 2 : i32
    %24 = vector.broadcast %c2_i32_4 : i32 to vector<16x32xi32>
    %25 = arith.muli %24, %17 : vector<16x32xi32>
    %c1_i32 = arith.constant 1 : i32
    %26 = vector.broadcast %c1_i32 : i32 to vector<16x32xi32>
    %27 = arith.addi %25, %26 : vector<16x32xi32>
    %28 = arith.cmpi eq, %18, %27 : vector<16x32xi32>
    %29 = arith.extui %28 : vector<16x32xi1> to vector<16x32xi32>
    %30 = arith.sitofp %29 : vector<16x32xi32> to vector<16x32xf32>
    %cst_5 = arith.constant dense<0.000000e+00> : vector<16x8xf32>
    %31 = tpu.matmul %23, %16, %cst_5 {dimension_numbers = #tpu.dot_dimension_numbers<[1], [0], [0], [1], [0, 0, 1, 1], [], []>} : vector<16x32xf32>, vector<32x8xf32>, vector<16x8xf32> -> vector<16x8xf32>
    %cst_6 = arith.constant dense<0.000000e+00> : vector<16x8xf32>
    %32 = tpu.matmul %30, %16, %cst_6 {dimension_numbers = #tpu.dot_dimension_numbers<[1], [0], [0], [1], [0, 0, 1, 1], [], []>} : vector<16x32xf32>, vector<32x8xf32>, vector<16x8xf32> -> vector<16x8xf32>
    %33 = arith.maximumf %31, %32 : vector<16x8xf32>
    %cst_7 = arith.constant 0.000000e+00 : f32
    %34 = vector.broadcast %cst_7 : f32 to vector<2x8xf32>
    %35 = vector.extract_strided_slice %33 {offsets = [0, 0], sizes = [8, 8], strides = [1, 1]} : vector<16x8xf32> to vector<8x8xf32>
    %36 = vector.extract_strided_slice %33 {offsets = [8, 0], sizes = [8, 8], strides = [1, 1]} : vector<16x8xf32> to vector<8x8xf32>
    %37 = tpu.concatenate %34, %35, %34, %34, %36, %34 in 0 : vector<2x8xf32>, vector<8x8xf32>, vector<2x8xf32>, vector<2x8xf32>, vector<8x8xf32>, vector<2x8xf32> -> vector<24x8xf32>
    %38 = vector.extract_strided_slice %37 {offsets = [0, 0], sizes = [8, 8], strides = [1, 1]} : vector<24x8xf32> to vector<8x8xf32>
    %39 = vector.extract_strided_slice %37 {offsets = [12, 0], sizes = [8, 8], strides = [1, 1]} : vector<24x8xf32> to vector<8x8xf32>
    %40 = tpu.concatenate %38, %39 in 0 : vector<8x8xf32>, vector<8x8xf32> -> vector<16x8xf32>
    %41 = vector.extract_strided_slice %37 {offsets = [1, 0], sizes = [8, 8], strides = [1, 1]} : vector<24x8xf32> to vector<8x8xf32>
    %42 = vector.extract_strided_slice %37 {offsets = [13, 0], sizes = [8, 8], strides = [1, 1]} : vector<24x8xf32> to vector<8x8xf32>
    %43 = tpu.concatenate %41, %42 in 0 : vector<8x8xf32>, vector<8x8xf32> -> vector<16x8xf32>
    %44 = vector.extract_strided_slice %37 {offsets = [2, 0], sizes = [8, 8], strides = [1, 1]} : vector<24x8xf32> to vector<8x8xf32>
    %45 = vector.extract_strided_slice %37 {offsets = [14, 0], sizes = [8, 8], strides = [1, 1]} : vector<24x8xf32> to vector<8x8xf32>
    %46 = tpu.concatenate %44, %45 in 0 : vector<8x8xf32>, vector<8x8xf32> -> vector<16x8xf32>
    %47 = vector.extract_strided_slice %37 {offsets = [3, 0], sizes = [8, 8], strides = [1, 1]} : vector<24x8xf32> to vector<8x8xf32>
    %48 = vector.extract_strided_slice %37 {offsets = [15, 0], sizes = [8, 8], strides = [1, 1]} : vector<24x8xf32> to vector<8x8xf32>
    %49 = tpu.concatenate %47, %48 in 0 : vector<8x8xf32>, vector<8x8xf32> -> vector<16x8xf32>
    %50 = vector.extract_strided_slice %37 {offsets = [4, 0], sizes = [8, 8], strides = [1, 1]} : vector<24x8xf32> to vector<8x8xf32>
    %51 = vector.extract_strided_slice %37 {offsets = [16, 0], sizes = [8, 8], strides = [1, 1]} : vector<24x8xf32> to vector<8x8xf32>
    %52 = tpu.concatenate %50, %51 in 0 : vector<8x8xf32>, vector<8x8xf32> -> vector<16x8xf32>
    %53 = tpu.concatenate %40, %43, %46, %49, %52 in 1 : vector<16x8xf32>, vector<16x8xf32>, vector<16x8xf32>, vector<16x8xf32>, vector<16x8xf32> -> vector<16x40xf32>
    %cst_8 = arith.constant dense<0.000000e+00> : vector<16x16xf32>
    %54 = tpu.matmul %53, %3, %cst_8 {dimension_numbers = #tpu.dot_dimension_numbers<[1], [0], [0], [1], [0, 0, 1, 1], [], []>} : vector<16x40xf32>, vector<40x16xf32>, vector<16x16xf32> -> vector<16x16xf32>
    %55 = vector.broadcast %8 : vector<1x16xf32> to vector<16x16xf32>
    %56 = arith.addf %54, %55 : vector<16x16xf32>
    %cst_9 = arith.constant 0.000000e+00 : f32
    %57 = vector.broadcast %cst_9 : f32 to vector<16x16xf32>
    %58 = arith.maximumf %56, %57 : vector<16x16xf32>
    %59 = tpu.iota {dimensions = array<i32: 0>} : vector<8x16xi32>
    %60 = tpu.iota {dimensions = array<i32: 1>} : vector<8x16xi32>
    %c2_i32_10 = arith.constant 2 : i32
    %61 = vector.broadcast %c2_i32_10 : i32 to vector<8x16xi32>
    %62 = arith.muli %61, %59 : vector<8x16xi32>
    %63 = arith.cmpi eq, %60, %62 : vector<8x16xi32>
    %64 = arith.extui %63 : vector<8x16xi1> to vector<8x16xi32>
    %65 = arith.sitofp %64 : vector<8x16xi32> to vector<8x16xf32>
    %c2_i32_11 = arith.constant 2 : i32
    %66 = vector.broadcast %c2_i32_11 : i32 to vector<8x16xi32>
    %67 = arith.muli %66, %59 : vector<8x16xi32>
    %c1_i32_12 = arith.constant 1 : i32
    %68 = vector.broadcast %c1_i32_12 : i32 to vector<8x16xi32>
    %69 = arith.addi %67, %68 : vector<8x16xi32>
    %70 = arith.cmpi eq, %60, %69 : vector<8x16xi32>
    %71 = arith.extui %70 : vector<8x16xi1> to vector<8x16xi32>
    %72 = arith.sitofp %71 : vector<8x16xi32> to vector<8x16xf32>
    %cst_13 = arith.constant dense<0.000000e+00> : vector<8x16xf32>
    %73 = tpu.matmul %65, %58, %cst_13 {dimension_numbers = #tpu.dot_dimension_numbers<[1], [0], [0], [1], [0, 0, 1, 1], [], []>} : vector<8x16xf32>, vector<16x16xf32>, vector<8x16xf32> -> vector<8x16xf32>
    %cst_14 = arith.constant dense<0.000000e+00> : vector<8x16xf32>
    %74 = tpu.matmul %72, %58, %cst_14 {dimension_numbers = #tpu.dot_dimension_numbers<[1], [0], [0], [1], [0, 0, 1, 1], [], []>} : vector<8x16xf32>, vector<16x16xf32>, vector<8x16xf32> -> vector<8x16xf32>
    %75 = arith.maximumf %73, %74 : vector<8x16xf32>
    %cst_15 = arith.constant 0.000000e+00 : f32
    %76 = vector.broadcast %cst_15 : f32 to vector<2x16xf32>
    %77 = vector.extract_strided_slice %75 {offsets = [0, 0], sizes = [4, 16], strides = [1, 1]} : vector<8x16xf32> to vector<4x16xf32>
    %78 = vector.extract_strided_slice %75 {offsets = [4, 0], sizes = [4, 16], strides = [1, 1]} : vector<8x16xf32> to vector<4x16xf32>
    %79 = tpu.concatenate %76, %77, %76, %76, %78, %76 in 0 : vector<2x16xf32>, vector<4x16xf32>, vector<2x16xf32>, vector<2x16xf32>, vector<4x16xf32>, vector<2x16xf32> -> vector<16x16xf32>
    %80 = vector.extract_strided_slice %79 {offsets = [0, 0], sizes = [4, 16], strides = [1, 1]} : vector<16x16xf32> to vector<4x16xf32>
    %81 = vector.extract_strided_slice %79 {offsets = [8, 0], sizes = [4, 16], strides = [1, 1]} : vector<16x16xf32> to vector<4x16xf32>
    %82 = tpu.concatenate %80, %81 in 0 : vector<4x16xf32>, vector<4x16xf32> -> vector<8x16xf32>
    %83 = vector.extract_strided_slice %79 {offsets = [1, 0], sizes = [4, 16], strides = [1, 1]} : vector<16x16xf32> to vector<4x16xf32>
    %84 = vector.extract_strided_slice %79 {offsets = [9, 0], sizes = [4, 16], strides = [1, 1]} : vector<16x16xf32> to vector<4x16xf32>
    %85 = tpu.concatenate %83, %84 in 0 : vector<4x16xf32>, vector<4x16xf32> -> vector<8x16xf32>
    %86 = vector.extract_strided_slice %79 {offsets = [2, 0], sizes = [4, 16], strides = [1, 1]} : vector<16x16xf32> to vector<4x16xf32>
    %87 = vector.extract_strided_slice %79 {offsets = [10, 0], sizes = [4, 16], strides = [1, 1]} : vector<16x16xf32> to vector<4x16xf32>
    %88 = tpu.concatenate %86, %87 in 0 : vector<4x16xf32>, vector<4x16xf32> -> vector<8x16xf32>
    %89 = vector.extract_strided_slice %79 {offsets = [3, 0], sizes = [4, 16], strides = [1, 1]} : vector<16x16xf32> to vector<4x16xf32>
    %90 = vector.extract_strided_slice %79 {offsets = [11, 0], sizes = [4, 16], strides = [1, 1]} : vector<16x16xf32> to vector<4x16xf32>
    %91 = tpu.concatenate %89, %90 in 0 : vector<4x16xf32>, vector<4x16xf32> -> vector<8x16xf32>
    %92 = vector.extract_strided_slice %79 {offsets = [4, 0], sizes = [4, 16], strides = [1, 1]} : vector<16x16xf32> to vector<4x16xf32>
    %93 = vector.extract_strided_slice %79 {offsets = [12, 0], sizes = [4, 16], strides = [1, 1]} : vector<16x16xf32> to vector<4x16xf32>
    %94 = tpu.concatenate %92, %93 in 0 : vector<4x16xf32>, vector<4x16xf32> -> vector<8x16xf32>
    %95 = tpu.concatenate %82, %85, %88, %91, %94 in 1 : vector<8x16xf32>, vector<8x16xf32>, vector<8x16xf32>, vector<8x16xf32>, vector<8x16xf32> -> vector<8x80xf32>
    %cst_16 = arith.constant dense<0.000000e+00> : vector<8x32xf32>
    %96 = tpu.matmul %95, %4, %cst_16 {dimension_numbers = #tpu.dot_dimension_numbers<[1], [0], [0], [1], [0, 0, 1, 1], [], []>} : vector<8x80xf32>, vector<80x32xf32>, vector<8x32xf32> -> vector<8x32xf32>
    %97 = vector.broadcast %9 : vector<1x32xf32> to vector<8x32xf32>
    %98 = arith.addf %96, %97 : vector<8x32xf32>
    %cst_17 = arith.constant 0.000000e+00 : f32
    %99 = vector.broadcast %cst_17 : f32 to vector<8x32xf32>
    %100 = arith.maximumf %98, %99 : vector<8x32xf32>
    %101 = tpu.iota {dimensions = array<i32: 0>} : vector<2x8xi32>
    %102 = tpu.iota {dimensions = array<i32: 1>} : vector<2x8xi32>
    %c4_i32 = arith.constant 4 : i32
    %103 = vector.broadcast %c4_i32 : i32 to vector<2x8xi32>
    %104 = arith.muli %101, %103 : vector<2x8xi32>
    %105 = arith.cmpi sge, %102, %104 : vector<2x8xi32>
    %c1_i32_18 = arith.constant 1 : i32
    %106 = vector.broadcast %c1_i32_18 : i32 to vector<2x8xi32>
    %107 = arith.addi %101, %106 : vector<2x8xi32>
    %c4_i32_19 = arith.constant 4 : i32
    %108 = vector.broadcast %c4_i32_19 : i32 to vector<2x8xi32>
    %109 = arith.muli %107, %108 : vector<2x8xi32>
    %110 = arith.cmpi slt, %102, %109 : vector<2x8xi32>
    %111 = arith.andi %105, %110 : vector<2x8xi1>
    %112 = arith.extui %111 : vector<2x8xi1> to vector<2x8xi32>
    %113 = arith.sitofp %112 : vector<2x8xi32> to vector<2x8xf32>
    %cst_20 = arith.constant dense<0.000000e+00> : vector<2x32xf32>
    %114 = tpu.matmul %113, %100, %cst_20 {dimension_numbers = #tpu.dot_dimension_numbers<[1], [0], [0], [1], [0, 0, 1, 1], [], []>} : vector<2x8xf32>, vector<8x32xf32>, vector<2x32xf32> -> vector<2x32xf32>
    %cst_21 = arith.constant 2.500000e-01 : f32
    %115 = vector.broadcast %cst_21 : f32 to vector<2x32xf32>
    %116 = arith.mulf %114, %115 : vector<2x32xf32>
    %117 = vector.extract_strided_slice %0 {offsets = [0, 8], sizes = [32, 4], strides = [1, 1]} : vector<32x20xf32> to vector<32x4xf32>
    %118 = tpu.iota {dimensions = array<i32: 0>} : vector<2x32xi32>
    %119 = tpu.iota {dimensions = array<i32: 1>} : vector<2x32xi32>
    %c16_i32 = arith.constant 16 : i32
    %120 = vector.broadcast %c16_i32 : i32 to vector<2x32xi32>
    %121 = arith.muli %118, %120 : vector<2x32xi32>
    %122 = arith.cmpi sge, %119, %121 : vector<2x32xi32>
    %c1_i32_22 = arith.constant 1 : i32
    %123 = vector.broadcast %c1_i32_22 : i32 to vector<2x32xi32>
    %124 = arith.addi %118, %123 : vector<2x32xi32>
    %c16_i32_23 = arith.constant 16 : i32
    %125 = vector.broadcast %c16_i32_23 : i32 to vector<2x32xi32>
    %126 = arith.muli %124, %125 : vector<2x32xi32>
    %127 = arith.cmpi slt, %119, %126 : vector<2x32xi32>
    %128 = arith.andi %122, %127 : vector<2x32xi1>
    %129 = arith.extui %128 : vector<2x32xi1> to vector<2x32xi32>
    %130 = arith.sitofp %129 : vector<2x32xi32> to vector<2x32xf32>
    %cst_24 = arith.constant dense<0.000000e+00> : vector<2x4xf32>
    %131 = tpu.matmul %130, %117, %cst_24 {dimension_numbers = #tpu.dot_dimension_numbers<[1], [0], [0], [1], [0, 0, 1, 1], [], []>} : vector<2x32xf32>, vector<32x4xf32>, vector<2x4xf32> -> vector<2x4xf32>
    %cst_25 = arith.constant 6.250000e-02 : f32
    %132 = vector.broadcast %cst_25 : f32 to vector<2x4xf32>
    %133 = arith.mulf %131, %132 : vector<2x4xf32>
    %cst_26 = arith.constant dense<0.000000e+00> : vector<2x32xf32>
    %134 = tpu.matmul %133, %5, %cst_26 {dimension_numbers = #tpu.dot_dimension_numbers<[1], [0], [0], [1], [0, 0, 1, 1], [], []>} : vector<2x4xf32>, vector<4x32xf32>, vector<2x32xf32> -> vector<2x32xf32>
    %135 = vector.broadcast %10 : vector<1x32xf32> to vector<2x32xf32>
    %136 = arith.addf %134, %135 : vector<2x32xf32>
    %137 = arith.addf %116, %136 : vector<2x32xf32>
    %cst_27 = arith.constant dense<0.000000e+00> : vector<2x3xf32>
    %138 = tpu.matmul %137, %6, %cst_27 {dimension_numbers = #tpu.dot_dimension_numbers<[1], [0], [0], [1], [0, 0, 1, 1], [], []>} : vector<2x32xf32>, vector<32x3xf32>, vector<2x3xf32> -> vector<2x3xf32>
    %139 = vector.broadcast %11 : vector<1x3xf32> to vector<2x3xf32>
    %140 = arith.addf %138, %139 : vector<2x3xf32>
    %c0_28 = arith.constant 0 : index
    %c0_29 = arith.constant 0 : index
    %141 = vector.load %arg2[%c0_28, %c0_29] : memref<2x3xf32, #tpu.memory_space<vmem>>, vector<2x3xf32>
    tpu.vector_store %arg2[%c0_28, %c0_29], %140 {strides = array<i32>} : memref<2x3xf32, #tpu.memory_space<vmem>>, vector<2x3xf32>,
    return
  }
}

</mosaic_0001>

<llo_original>
// kernel: tpu_custom_call.1
$region0: #{tpu_custom_call.1}
  #allocation0 [shape = 'u32[]', space=smem, size = 0x4, offset = 0x4, fixed_abs, tag = 'smem constant byte address 0x4 - core index']
  #allocation1 [shape = 'u32[144,128]{1,0:T(1,128)}', space=vmem, size = 0x12000, scoped, tag = 'internal scratch']
  %s0 = inlined_call_operand.vmem [shape: f32[32,20], index: 0, kind: input, shape index: {}]
  %s1 = inlined_call_operand.hbm [shape: f32[88,128], index: 1, kind: input, shape index: {}]
  %s2 = inlined_call_operand.hbm [shape: f32[2,3], index: 2, kind: output, shape index: {}]
  %s3 = sld [smem:[#allocation0]]
  $region22: #{tpu_custom_call.1} parent=0
    _
  %s5 = ssub.s32 1, %s3
  %s6 = scalar_select 0, %s5, %s3
  $region1: #{tpu_custom_call.1} parent=0
    #allocation2 [shape = 'u8[45056]{0}', space=vmem, size = 0xb000, scoped, tag = 'input window, operand 1, single buffered']
    #allocation3 [shape = 's32[1]{0}', space=sflag, size = 0x4, scoped, tag = 'scoped memory for tpu_custom_call.1']
    #allocation4 [shape = 's32[1]{0}', space=sflag, size = 0x4, scoped, tag = 'scoped memory for tpu_custom_call.1']
    #allocation5 [shape = 'u8[1024]{0}', space=vmem, size = 0x400, scoped, tag = 'output window, operand 0, single buffered']
    %7 = vsyncpa [#allocation3], 0
    %8 = vsyncpa [#allocation4], 0
    // Predicated region
    $region2: #{tpu_custom_call.1} parent=1 // pred_check
      _
    $region3: #{tpu_custom_call.1} parent=1 // pred_check_branch
      %10 = sbr.rel (0) target = $region5
    $region4: #{tpu_custom_call.1} parent=1 // pred_region
      _
    $region5: #{tpu_custom_call.1} parent=1 // pred_fallthru
      _
    // Predicated region
    $region6: #{tpu_custom_call.1} parent=1 // pred_check
      _
    $region7: #{tpu_custom_call.1} parent=1 // pred_check_branch
      %12 = sbr.rel (0) target = $region9
    $region8: #{tpu_custom_call.1} parent=1 // pred_region
      %s14 = ssub.s32 1408, 1408
      %15 = vsyncadd [#allocation3], %s14
      %s16 = sshll.u32 [#allocation2], 4
      %s17 = int_to_ptr.vmem [resolvable:$true] %s16
      %22 = dma.hbm_to_vmem [thread:$0]  %s1, 1408, %s17, [#allocation3], 128, 128, 8
    $region9: #{tpu_custom_call.1} parent=1 // pred_fallthru
      _
    // Predicated region
    $region10: #{tpu_custom_call.1} parent=1 // pred_check
      _
    $region11: #{tpu_custom_call.1} parent=1 // pred_check_branch
      %24 = sbr.rel (0) target = $region13
    $region12: #{tpu_custom_call.1} parent=1 // pred_region
      %25 = dma.done [#allocation3], 1408
    $region13: #{tpu_custom_call.1} parent=1 // pred_fallthru
      _
    %v26 = vld [vmem:[%s0] sm:$0xff]
    %v27 = vld [vmem:[%s0 + $0x8] sm:$0xff]
    %v28 = vld [vmem:[%s0 + $0x10] sm:$0xff]
    %v29 = vld [vmem:[%s0 + $0x18] sm:$0xff]
    %v30 = vld [vmem:[#allocation2] sm:$0xff]
    %v31 = vld [vmem:[#allocation2 + $0x8] sm:$0xff]
    %v32 = vld [vmem:[#allocation2 + $0x10] sm:$0xff]
    %v33 = vld [vmem:[#allocation2 + $0x18] sm:$0xff]
    %v34 = vld [vmem:[#allocation2 + $0x20] sm:$0xff]
    %v35 = vld [vmem:[#allocation2 + $0x28] sm:$0xff]
    %v36 = vld [vmem:[#allocation2 + $0x30] sm:$0xff]
    %v37 = vld [vmem:[#allocation2 + $0x38] sm:$0xff]
    %v38 = vld [vmem:[#allocation2 + $0x40] sm:$0xff]
    %v39 = vld [vmem:[#allocation2 + $0x48] sm:$0xff]
    %v40 = vld [vmem:[#allocation2 + $0x50] sm:$0xff]
    %v41 = vlaneseq
    %v42 = vshrl.u32 %v41, 7
    %v43 = vsub.s32 0, %v42
    %v44 = vrot.slane %v40, %v43
    %vm45 = vcmask 162816
    %v47 = vsel %vm45, %v26, 0
    %v50 = vsel %vm45, %v27, 0
    %v53 = vsel %vm45, %v28, 0
    %v56 = vsel %vm45, %v29, 0
    %vm58 = vcmask 1043456
    %v60 = vsel %vm58, %v32, 0
    %62 = vmatprep.subr.mxu0 0.0
    %63 = vmatpush1.msra.mxu0 0.0
    %64 = vmatprep.subr.mxu0 0.0
    %65 = vmatpush1.msra.mxu0 0.0
    %66 = vmatprep.subr.mxu0 0.0
    %67 = vmatpush1.msra.mxu0 0.0
    %68 = vmatprep.subr.mxu0 0.0
    %69 = vmatpush1.msra.mxu0 0.0
    %70 = vmatprep.subr.mxu0 0.0
    %71 = vmatpush1.msra.mxu0 0.0
    %72 = vmatprep.subr.mxu0 0.0
    %73 = vmatpush1.msra.mxu0 0.0
    %74 = vmatprep.subr.mxu0 0.0
    %75 = vmatpush1.msra.mxu0 0.0
    %76 = vmatprep.subr.mxu0 0.0
    %77 = vmatpush1.msra.mxu0 0.0
    %78 = vmatprep.subr.mxu0 0.0
    %79 = vmatpush1.msra.mxu0 0.0
    %80 = vmatprep.subr.mxu0 0.0
    %81 = vmatpush1.msra.mxu0 0.0
    %82 = vmatprep.subr.mxu0 0.0
    %83 = vmatpush1.msra.mxu0 0.0
    %84 = vmatprep.subr.mxu0 0.0
    %85 = vmatpush1.msra.mxu0 0.0
    %86 = vmatprep.subr.mxu0 0.0
    %87 = vmatpush1.msra.mxu0 0.0
    %88 = vmatprep.subr.mxu0 0.0
    %89 = vmatpush1.msra.mxu0 %v60
    %90 = vmatprep.subr.mxu0 0.0
    %91 = vmatpush1.msra.mxu0 %v31
    %92 = vmatprep.subr.mxu0 0.0
    %93 = vmatpush1.msra.mxu0 %v30
    %94 = vmatprep.subr.mxu0 0.0
    %95 = vmatpush2.msra.mxu0 0.0
    %96 = vmatprep.subr.mxu0 0.0
    %97 = vmatpush2.msra.mxu0 0.0
    %98 = vmatprep.subr.mxu0 0.0
    %99 = vmatpush2.msra.mxu0 0.0
    %100 = vmatprep.subr.mxu0 0.0
    %101 = vmatpush2.msra.mxu0 0.0
    %102 = vmatprep.subr.mxu0 0.0
    %103 = vmatpush2.msra.mxu0 0.0
    %104 = vmatprep.subr.mxu0 0.0
    %105 = vmatpush2.msra.mxu0 0.0
    %106 = vmatprep.subr.mxu0 0.0
    %107 = vmatpush2.msra.mxu0 0.0
    %108 = vmatprep.subr.mxu0 0.0
    %109 = vmatpush2.msra.mxu0 0.0
    %110 = vmatprep.subr.mxu0 0.0
    %111 = vmatpush2.msra.mxu0 0.0
    %112 = vmatprep.subr.mxu0 0.0
    %113 = vmatpush2.msra.mxu0 0.0
    %114 = vmatprep.subr.mxu0 0.0
    %115 = vmatpush2.msra.mxu0 0.0
    %116 = vmatprep.subr.mxu0 0.0
    %117 = vmatpush2.msra.mxu0 0.0
    %118 = vmatprep.subr.mxu0 0.0
    %119 = vmatpush2.msra.mxu0 0.0
    %120 = vmatprep.subr.mxu0 0.0
    %121 = vmatpush2.msra.mxu0 0.0
    %122 = vmatprep.subr.mxu0 0.0
    %123 = vmatpush2.msra.mxu0 0.0
    %124 = vmatprep.subr.mxu0 0.0
    %125 = vmatpush2.msra.mxu0 0.0
    %126 = vmatprep.mubr.f32.mxu0 0.0
    %127 = vmatmul.mubr.f32.gmra.mxu0 %v47
    %v128 = vpop.f32.mrf.mxu0
    %v129 = vadd.f32 %v44, %v128
    %v130 = vpop.f32.mrf.mxu0
    %131 = vmatprep.mubr.f32.mxu0 0.0
    %132 = vmatmul.mubr.f32.gmra.mxu0 %v50
    %v133 = vpop.f32.mrf.mxu0
    %v134 = vadd.f32 %v44, %v133
    %v135 = vpop.f32.mrf.mxu0
    %136 = vmatprep.mubr.f32.mxu0 0.0
    %137 = vmatmul.mubr.f32.gmra.mxu0 %v53
    %v138 = vpop.f32.mrf.mxu0
    %v139 = vadd.f32 %v44, %v138
    %v140 = vpop.f32.mrf.mxu0
    %141 = vmatprep.mubr.f32.mxu0 0.0
    %142 = vmatmul.mubr.f32.gmra.mxu0 %v56
    %v143 = vpop.f32.mrf.mxu0
    %v144 = vadd.f32 %v44, %v143
    %v145 = vpop.f32.mrf.mxu0
    %146 = vdwg.mxu0
    %v147 = vmax.f32 %v129, 0.0
    %v148 = vmax.f32 %v134, 0.0
    %v149 = vmax.f32 %v139, 0.0
    %v150 = vmax.f32 %v144, 0.0
    %v151 = vlaneseq
    %v152 = vshrl.u32 %v151, 7
    %v153 = vadd.s32 %v152, 8
    %v154 = vlaneseq
    %v155 = vand.u32 %v154, 127
    %v156 = vmul.u32 %v152, 2
    %v157 = vmul.u32 %v153, 2
    %vm158 = vcmp.eq.s32.totalorder %v155, %v156
    %vm159 = vcmp.eq.s32.totalorder %v155, %v157
    %v160 = vsel %vm158, 1, 0
    %v161 = vsel %vm159, 1, 0
    %v162 = vcvt.s32.f32 %v160
    %v163 = vcvt.s32.f32 %v161
    %v164 = vadd.s32 %v156, 1
    %v165 = vadd.s32 %v157, 1
    %vm166 = vcmp.eq.s32.totalorder %v155, %v164
    %vm167 = vcmp.eq.s32.totalorder %v155, %v165
    %v168 = vsel %vm166, 1, 0
    %v169 = vsel %vm167, 1, 0
    %v170 = vcvt.s32.f32 %v168
    %v171 = vcvt.s32.f32 %v169
    %vm172 = vcmask 261120
    %v174 = vsel %vm172, %v162, 0
    %v177 = vsel %vm172, %v163, 0
    %179 = vmatprep.subr.mxu0 0.0
    %180 = vmatpush1.msra.mxu0 0.0
    %181 = vmatprep.subr.mxu0 0.0
    %182 = vmatpush1.msra.mxu0 0.0
    %183 = vmatprep.subr.mxu0 0.0
    %184 = vmatpush1.msra.mxu0 0.0
    %185 = vmatprep.subr.mxu0 0.0
    %186 = vmatpush1.msra.mxu0 0.0
    %187 = vmatprep.subr.mxu0 0.0
    %188 = vmatpush1.msra.mxu0 0.0
    %189 = vmatprep.subr.mxu0 0.0
    %190 = vmatpush1.msra.mxu0 0.0
    %191 = vmatprep.subr.mxu0 0.0
    %192 = vmatpush1.msra.mxu0 0.0
    %193 = vmatprep.subr.mxu0 0.0
    %194 = vmatpush1.msra.mxu0 0.0
    %195 = vmatprep.subr.mxu0 0.0
    %196 = vmatpush1.msra.mxu0 0.0
    %197 = vmatprep.subr.mxu0 0.0
    %198 = vmatpush1.msra.mxu0 0.0
    %199 = vmatprep.subr.mxu0 0.0
    %200 = vmatpush1.msra.mxu0 0.0
    %201 = vmatprep.subr.mxu0 0.0
    %202 = vmatpush1.msra.mxu0 0.0
    %203 = vmatprep.subr.mxu0 0.0
    %204 = vmatpush1.msra.mxu0 %v150
    %205 = vmatprep.subr.mxu0 0.0
    %206 = vmatpush1.msra.mxu0 %v149
    %207 = vmatprep.subr.mxu0 0.0
    %208 = vmatpush1.msra.mxu0 %v148
    %209 = vmatprep.subr.mxu0 0.0
    %210 = vmatpush1.msra.mxu0 %v147
    %211 = vmatprep.subr.mxu0 0.0
    %212 = vmatpush2.msra.mxu0 0.0
    %213 = vmatprep.subr.mxu0 0.0
    %214 = vmatpush2.msra.mxu0 0.0
    %215 = vmatprep.subr.mxu0 0.0
    %216 = vmatpush2.msra.mxu0 0.0
    %217 = vmatprep.subr.mxu0 0.0
    %218 = vmatpush2.msra.mxu0 0.0
    %219 = vmatprep.subr.mxu0 0.0
    %220 = vmatpush2.msra.mxu0 0.0
    %221 = vmatprep.subr.mxu0 0.0
    %222 = vmatpush2.msra.mxu0 0.0
    %223 = vmatprep.subr.mxu0 0.0
    %224 = vmatpush2.msra.mxu0 0.0
    %225 = vmatprep.subr.mxu0 0.0
    %226 = vmatpush2.msra.mxu0 0.0
    %227 = vmatprep.subr.mxu0 0.0
    %228 = vmatpush2.msra.mxu0 0.0
    %229 = vmatprep.subr.mxu0 0.0
    %230 = vmatpush2.msra.mxu0 0.0
    %231 = vmatprep.subr.mxu0 0.0
    %232 = vmatpush2.msra.mxu0 0.0
    %233 = vmatprep.subr.mxu0 0.0
    %234 = vmatpush2.msra.mxu0 0.0
    %235 = vmatprep.subr.mxu0 0.0
    %236 = vmatpush2.msra.mxu0 0.0
    %237 = vmatprep.subr.mxu0 0.0
    %238 = vmatpush2.msra.mxu0 0.0
    %239 = vmatprep.subr.mxu0 0.0
    %240 = vmatpush2.msra.mxu0 0.0
    %241 = vmatprep.subr.mxu0 0.0
    %242 = vmatpush2.msra.mxu0 0.0
    %243 = vmatprep.mubr.f32.mxu0 0.0
    %244 = vmatmul.mubr.f32.gmra.mxu0 %v174
    %v245 = vpop.f32.mrf.mxu0
    %v246 = vadd.f32 0.0, %v245
    %v247 = vpop.f32.mrf.mxu0
    %248 = vmatprep.mubr.f32.mxu0 0.0
    %249 = vmatmul.mubr.f32.gmra.mxu0 %v177
    %v250 = vpop.f32.mrf.mxu0
    %v251 = vadd.f32 0.0, %v250
    %v252 = vpop.f32.mrf.mxu0
    %253 = vdwg.mxu0
    %v255 = vsel %vm172, %v170, 0
    %v258 = vsel %vm172, %v171, 0
    %260 = vmatprep.subr.mxu0 0.0
    %261 = vmatpush1.msra.mxu0 0.0
    %262 = vmatprep.subr.mxu0 0.0
    %263 = vmatpush1.msra.mxu0 0.0
    %264 = vmatprep.subr.mxu0 0.0
    %265 = vmatpush1.msra.mxu0 0.0
    %266 = vmatprep.subr.mxu0 0.0
    %267 = vmatpush1.msra.mxu0 0.0
    %268 = vmatprep.subr.mxu0 0.0
    %269 = vmatpush1.msra.mxu0 0.0
    %270 = vmatprep.subr.mxu0 0.0
    %271 = vmatpush1.msra.mxu0 0.0
    %272 = vmatprep.subr.mxu0 0.0
    %273 = vmatpush1.msra.mxu0 0.0
    %274 = vmatprep.subr.mxu0 0.0
    %275 = vmatpush1.msra.mxu0 0.0
    %276 = vmatprep.subr.mxu0 0.0
    %277 = vmatpush1.msra.mxu0 0.0
    %278 = vmatprep.subr.mxu0 0.0
    %279 = vmatpush1.msra.mxu0 0.0
    %280 = vmatprep.subr.mxu0 0.0
    %281 = vmatpush1.msra.mxu0 0.0
    %282 = vmatprep.subr.mxu0 0.0
    %283 = vmatpush1.msra.mxu0 0.0
    %284 = vmatprep.subr.mxu0 0.0
    %285 = vmatpush1.msra.mxu0 %v150
    %286 = vmatprep.subr.mxu0 0.0
    %287 = vmatpush1.msra.mxu0 %v149
    %288 = vmatprep.subr.mxu0 0.0
    %289 = vmatpush1.msra.mxu0 %v148
    %290 = vmatprep.subr.mxu0 0.0
    %291 = vmatpush1.msra.mxu0 %v147
    %292 = vmatprep.subr.mxu0 0.0
    %293 = vmatpush2.msra.mxu0 0.0
    %294 = vmatprep.subr.mxu0 0.0
    %295 = vmatpush2.msra.mxu0 0.0
    %296 = vmatprep.subr.mxu0 0.0
    %297 = vmatpush2.msra.mxu0 0.0
    %298 = vmatprep.subr.mxu0 0.0
    %299 = vmatpush2.msra.mxu0 0.0
    %300 = vmatprep.subr.mxu0 0.0
    %301 = vmatpush2.msra.mxu0 0.0
    %302 = vmatprep.subr.mxu0 0.0
    %303 = vmatpush2.msra.mxu0 0.0
    %304 = vmatprep.subr.mxu0 0.0
    %305 = vmatpush2.msra.mxu0 0.0
    %306 = vmatprep.subr.mxu0 0.0
    %307 = vmatpush2.msra.mxu0 0.0
    %308 = vmatprep.subr.mxu0 0.0
    %309 = vmatpush2.msra.mxu0 0.0
    %310 = vmatprep.subr.mxu0 0.0
    %311 = vmatpush2.msra.mxu0 0.0
    %312 = vmatprep.subr.mxu0 0.0
    %313 = vmatpush2.msra.mxu0 0.0
    %314 = vmatprep.subr.mxu0 0.0
    %315 = vmatpush2.msra.mxu0 0.0
    %316 = vmatprep.subr.mxu0 0.0
    %317 = vmatpush2.msra.mxu0 0.0
    %318 = vmatprep.subr.mxu0 0.0
    %319 = vmatpush2.msra.mxu0 0.0
    %320 = vmatprep.subr.mxu0 0.0
    %321 = vmatpush2.msra.mxu0 0.0
    %322 = vmatprep.subr.mxu0 0.0
    %323 = vmatpush2.msra.mxu0 0.0
    %324 = vmatprep.mubr.f32.mxu0 0.0
    %325 = vmatmul.mubr.f32.gmra.mxu0 %v255
    %v326 = vpop.f32.mrf.mxu0
    %v327 = vadd.f32 0.0, %v326
    %v328 = vpop.f32.mrf.mxu0
    %329 = vmatprep.mubr.f32.mxu0 0.0
    %330 = vmatmul.mubr.f32.gmra.mxu0 %v258
    %v331 = vpop.f32.mrf.mxu0
    %v332 = vadd.f32 0.0, %v331
    %v333 = vpop.f32.mrf.mxu0
    %334 = vdwg.mxu0
    %v335 = vmax.f32 %v246, %v327
    %v336 = vmax.f32 %v251, %v332
    %v338 = vrot.slane %v335, 6
    %v341 = vrot.slane %v336, 2
    %vm343 = vcmask 1041408
    %v344 = vsel %vm343, 0.0, %v338
    %v345 = vsel %vm343, %v338, 0.0
    %v346 = vsel %vm58, %v345, 0.0
    %vm347 = vcmask 1045504
    %v348 = vsel %vm347, %v346, %v341
    %v349 = vsel %vm347, %v341, 0.0
    %v352 = vrot.slane %v348, 4
    %v353 = vrot.slane %v349, 4
    %v354 = vsel %vm58, %v352, %v353
    %vm357 = vcmask 1046528
    %v358 = vrot.slane %v344, 1
    %v359 = vrot.slane %v348, 1
    %v360 = vsel %vm357, %v358, %v359
    %vm361 = vcmask 1042432
    %v362 = vrot.slane %v348, 5
    %v363 = vrot.slane %v349, 5
    %v364 = vsel %vm361, %v362, %v363
    %v365 = vrot.slane %v344, 2
    %v366 = vrot.slane %v348, 2
    %v367 = vsel %vm347, %v365, %v366
    %v368 = vrot.slane %v348, 6
    %v369 = vrot.slane %v349, 6
    %v370 = vsel %vm343, %v368, %v369
    %vm371 = vcmask 1044480
    %v372 = vrot.slane %v344, 3
    %v373 = vrot.slane %v348, 3
    %v374 = vsel %vm371, %v372, %v373
    %vm375 = vcmask 1040384
    %v376 = vrot.slane %v348, 7
    %v377 = vrot.slane %v349, 7
    %v378 = vsel %vm375, %v376, %v377
    %v379 = vrot.slane %v344, 4
    %v380 = vsel %vm58, %v379, %v352
    %381 = vrot.lane.b32.xlu0 %v360, 8
    %v382 = vpop.permute.xlu0 %381
    %383 = vrot.lane.b32.xlu0 %v364, 8
    %v384 = vpop.permute.xlu0 %383
    %387 = vrot.lane.b32.xlu0 %v367, 16
    %v388 = vpop.permute.xlu0 %387
    %389 = vrot.lane.b32.xlu0 %v370, 16
    %v390 = vpop.permute.xlu0 %389
    %393 = vrot.lane.b32.xlu0 %v374, 24
    %v394 = vpop.permute.xlu0 %393
    %395 = vrot.lane.b32.xlu0 %v378, 24
    %v396 = vpop.permute.xlu0 %395
    %399 = vrot.lane.b32.xlu0 %v380, 32
    %v400 = vpop.permute.xlu0 %399
    %401 = vrot.lane.b32.xlu0 %v349, 32
    %v402 = vpop.permute.xlu0 %401
    %vm405 = vcmask 64512
    %v406 = vsel %vm405, %v344, %v382
    %v407 = vsel %vm405, %v354, %v384
    %vm408 = vcmask 130048
    %v409 = vsel %vm408, %v406, %v388
    %v410 = vsel %vm408, %v407, %v390
    %vm411 = vcmask 195584
    %v412 = vsel %vm411, %v409, %v394
    %v413 = vsel %vm411, %v410, %v396
    %v414 = vsel %vm172, %v412, %v400
    %v415 = vsel %vm172, %v413, %v402
    %v416 = vlaneseq
    %v417 = vshrl.u32 %v416, 7
    %v418 = vsub.s32 1, %v417
    %v419 = vrot.slane %v40, %v418
    %424 = vrot.lane.b32.xlu0 %v30, 120
    %v425 = vpop.permute.xlu0 %424
    %426 = vrot.lane.b32.xlu0 %v31, 120
    %v427 = vpop.permute.xlu0 %426
    %428 = vrot.lane.b32.xlu0 %v32, 120
    %v429 = vpop.permute.xlu0 %428
    %430 = vrot.lane.b32.xlu0 %v33, 120
    %v431 = vpop.permute.xlu0 %430
    %432 = vrot.lane.b32.xlu0 %v34, 120
    %v433 = vpop.permute.xlu0 %432
    %vm439 = vcmask 326656
    %v441 = vsel %vm439, %v414, 0
    %v444 = vsel %vm439, %v415, 0
    %446 = vmatprep.subr.mxu0 0.0
    %447 = vmatpush1.msra.mxu0 0.0
    %448 = vmatprep.subr.mxu0 0.0
    %449 = vmatpush1.msra.mxu0 0.0
    %450 = vmatprep.subr.mxu0 0.0
    %451 = vmatpush1.msra.mxu0 0.0
    %452 = vmatprep.subr.mxu0 0.0
    %453 = vmatpush1.msra.mxu0 0.0
    %454 = vmatprep.subr.mxu0 0.0
    %455 = vmatpush1.msra.mxu0 0.0
    %456 = vmatprep.subr.mxu0 0.0
    %457 = vmatpush1.msra.mxu0 0.0
    %458 = vmatprep.subr.mxu0 0.0
    %459 = vmatpush1.msra.mxu0 0.0
    %460 = vmatprep.subr.mxu0 0.0
    %461 = vmatpush1.msra.mxu0 0.0
    %462 = vmatprep.subr.mxu0 0.0
    %463 = vmatpush1.msra.mxu0 0.0
    %464 = vmatprep.subr.mxu0 0.0
    %465 = vmatpush1.msra.mxu0 0.0
    %466 = vmatprep.subr.mxu0 0.0
    %467 = vmatpush1.msra.mxu0 0.0
    %468 = vmatprep.subr.mxu0 0.0
    %469 = vmatpush1.msra.mxu0 %v433
    %470 = vmatprep.subr.mxu0 0.0
    %471 = vmatpush1.msra.mxu0 %v431
    %472 = vmatprep.subr.mxu0 0.0
    %473 = vmatpush1.msra.mxu0 %v429
    %474 = vmatprep.subr.mxu0 0.0
    %475 = vmatpush1.msra.mxu0 %v427
    %476 = vmatprep.subr.mxu0 0.0
    %477 = vmatpush1.msra.mxu0 %v425
    %478 = vmatprep.subr.mxu0 0.0
    %479 = vmatpush2.msra.mxu0 0.0
    %480 = vmatprep.subr.mxu0 0.0
    %481 = vmatpush2.msra.mxu0 0.0
    %482 = vmatprep.subr.mxu0 0.0
    %483 = vmatpush2.msra.mxu0 0.0
    %484 = vmatprep.subr.mxu0 0.0
    %485 = vmatpush2.msra.mxu0 0.0
    %486 = vmatprep.subr.mxu0 0.0
    %487 = vmatpush2.msra.mxu0 0.0
    %488 = vmatprep.subr.mxu0 0.0
    %489 = vmatpush2.msra.mxu0 0.0
    %490 = vmatprep.subr.mxu0 0.0
    %491 = vmatpush2.msra.mxu0 0.0
    %492 = vmatprep.subr.mxu0 0.0
    %493 = vmatpush2.msra.mxu0 0.0
    %494 = vmatprep.subr.mxu0 0.0
    %495 = vmatpush2.msra.mxu0 0.0
    %496 = vmatprep.subr.mxu0 0.0
    %497 = vmatpush2.msra.mxu0 0.0
    %498 = vmatprep.subr.mxu0 0.0
    %499 = vmatpush2.msra.mxu0 0.0
    %500 = vmatprep.subr.mxu0 0.0
    %501 = vmatpush2.msra.mxu0 0.0
    %502 = vmatprep.subr.mxu0 0.0
    %503 = vmatpush2.msra.mxu0 0.0
    %504 = vmatprep.subr.mxu0 0.0
    %505 = vmatpush2.msra.mxu0 0.0
    %506 = vmatprep.subr.mxu0 0.0
    %507 = vmatpush2.msra.mxu0 0.0
    %508 = vmatprep.subr.mxu0 0.0
    %509 = vmatpush2.msra.mxu0 0.0
    %510 = vmatprep.mubr.f32.mxu0 0.0
    %511 = vmatmul.mubr.f32.gmra.mxu0 %v441
    %v512 = vpop.f32.mrf.mxu0
    %v513 = vadd.f32 %v419, %v512
    %v514 = vpop.f32.mrf.mxu0
    %515 = vmatprep.mubr.f32.mxu0 0.0
    %516 = vmatmul.mubr.f32.gmra.mxu0 %v444
    %v517 = vpop.f32.mrf.mxu0
    %v518 = vadd.f32 %v419, %v517
    %v519 = vpop.f32.mrf.mxu0
    %520 = vdwg.mxu0
    %v521 = vmax.f32 %v513, 0.0
    %v522 = vmax.f32 %v518, 0.0
    %v523 = vsel %vm408, %v162, 0
    %525 = vmatprep.subr.mxu0 0.0
    %526 = vmatpush1.msra.mxu0 0.0
    %527 = vmatprep.subr.mxu0 0.0
    %528 = vmatpush1.msra.mxu0 0.0
    %529 = vmatprep.subr.mxu0 0.0
    %530 = vmatpush1.msra.mxu0 0.0
    %531 = vmatprep.subr.mxu0 0.0
    %532 = vmatpush1.msra.mxu0 0.0
    %533 = vmatprep.subr.mxu0 0.0
    %534 = vmatpush1.msra.mxu0 0.0
    %535 = vmatprep.subr.mxu0 0.0
    %536 = vmatpush1.msra.mxu0 0.0
    %537 = vmatprep.subr.mxu0 0.0
    %538 = vmatpush1.msra.mxu0 0.0
    %539 = vmatprep.subr.mxu0 0.0
    %540 = vmatpush1.msra.mxu0 0.0
    %541 = vmatprep.subr.mxu0 0.0
    %542 = vmatpush1.msra.mxu0 0.0
    %543 = vmatprep.subr.mxu0 0.0
    %544 = vmatpush1.msra.mxu0 0.0
    %545 = vmatprep.subr.mxu0 0.0
    %546 = vmatpush1.msra.mxu0 0.0
    %547 = vmatprep.subr.mxu0 0.0
    %548 = vmatpush1.msra.mxu0 0.0
    %549 = vmatprep.subr.mxu0 0.0
    %550 = vmatpush1.msra.mxu0 0.0
    %551 = vmatprep.subr.mxu0 0.0
    %552 = vmatpush1.msra.mxu0 0.0
    %553 = vmatprep.subr.mxu0 0.0
    %554 = vmatpush1.msra.mxu0 %v522
    %555 = vmatprep.subr.mxu0 0.0
    %556 = vmatpush1.msra.mxu0 %v521
    %557 = vmatprep.subr.mxu0 0.0
    %558 = vmatpush2.msra.mxu0 0.0
    %559 = vmatprep.subr.mxu0 0.0
    %560 = vmatpush2.msra.mxu0 0.0
    %561 = vmatprep.subr.mxu0 0.0
    %562 = vmatpush2.msra.mxu0 0.0
    %563 = vmatprep.subr.mxu0 0.0
    %564 = vmatpush2.msra.mxu0 0.0
    %565 = vmatprep.subr.mxu0 0.0
    %566 = vmatpush2.msra.mxu0 0.0
    %567 = vmatprep.subr.mxu0 0.0
    %568 = vmatpush2.msra.mxu0 0.0
    %569 = vmatprep.subr.mxu0 0.0
    %570 = vmatpush2.msra.mxu0 0.0
    %571 = vmatprep.subr.mxu0 0.0
    %572 = vmatpush2.msra.mxu0 0.0
    %573 = vmatprep.subr.mxu0 0.0
    %574 = vmatpush2.msra.mxu0 0.0
    %575 = vmatprep.subr.mxu0 0.0
    %576 = vmatpush2.msra.mxu0 0.0
    %577 = vmatprep.subr.mxu0 0.0
    %578 = vmatpush2.msra.mxu0 0.0
    %579 = vmatprep.subr.mxu0 0.0
    %580 = vmatpush2.msra.mxu0 0.0
    %581 = vmatprep.subr.mxu0 0.0
    %582 = vmatpush2.msra.mxu0 0.0
    %583 = vmatprep.subr.mxu0 0.0
    %584 = vmatpush2.msra.mxu0 0.0
    %585 = vmatprep.subr.mxu0 0.0
    %586 = vmatpush2.msra.mxu0 0.0
    %587 = vmatprep.subr.mxu0 0.0
    %588 = vmatpush2.msra.mxu0 0.0
    %589 = vmatprep.mubr.f32.mxu0 0.0
    %590 = vmatmul.mubr.f32.gmra.mxu0 %v523
    %v591 = vpop.f32.mrf.mxu0
    %v592 = vadd.f32 0.0, %v591
    %v593 = vpop.f32.mrf.mxu0
    %594 = vdwg.mxu0
    %v595 = vsel %vm408, %v170, 0
    %597 = vmatprep.subr.mxu0 0.0
    %598 = vmatpush1.msra.mxu0 0.0
    %599 = vmatprep.subr.mxu0 0.0
    %600 = vmatpush1.msra.mxu0 0.0
    %601 = vmatprep.subr.mxu0 0.0
    %602 = vmatpush1.msra.mxu0 0.0
    %603 = vmatprep.subr.mxu0 0.0
    %604 = vmatpush1.msra.mxu0 0.0
    %605 = vmatprep.subr.mxu0 0.0
    %606 = vmatpush1.msra.mxu0 0.0
    %607 = vmatprep.subr.mxu0 0.0
    %608 = vmatpush1.msra.mxu0 0.0
    %609 = vmatprep.subr.mxu0 0.0
    %610 = vmatpush1.msra.mxu0 0.0
    %611 = vmatprep.subr.mxu0 0.0
    %612 = vmatpush1.msra.mxu0 0.0
    %613 = vmatprep.subr.mxu0 0.0
    %614 = vmatpush1.msra.mxu0 0.0
    %615 = vmatprep.subr.mxu0 0.0
    %616 = vmatpush1.msra.mxu0 0.0
    %617 = vmatprep.subr.mxu0 0.0
    %618 = vmatpush1.msra.mxu0 0.0
    %619 = vmatprep.subr.mxu0 0.0
    %620 = vmatpush1.msra.mxu0 0.0
    %621 = vmatprep.subr.mxu0 0.0
    %622 = vmatpush1.msra.mxu0 0.0
    %623 = vmatprep.subr.mxu0 0.0
    %624 = vmatpush1.msra.mxu0 0.0
    %625 = vmatprep.subr.mxu0 0.0
    %626 = vmatpush1.msra.mxu0 %v522
    %627 = vmatprep.subr.mxu0 0.0
    %628 = vmatpush1.msra.mxu0 %v521
    %629 = vmatprep.subr.mxu0 0.0
    %630 = vmatpush2.msra.mxu0 0.0
    %631 = vmatprep.subr.mxu0 0.0
    %632 = vmatpush2.msra.mxu0 0.0
    %633 = vmatprep.subr.mxu0 0.0
    %634 = vmatpush2.msra.mxu0 0.0
    %635 = vmatprep.subr.mxu0 0.0
    %636 = vmatpush2.msra.mxu0 0.0
    %637 = vmatprep.subr.mxu0 0.0
    %638 = vmatpush2.msra.mxu0 0.0
    %639 = vmatprep.subr.mxu0 0.0
    %640 = vmatpush2.msra.mxu0 0.0
    %641 = vmatprep.subr.mxu0 0.0
    %642 = vmatpush2.msra.mxu0 0.0
    %643 = vmatprep.subr.mxu0 0.0
    %644 = vmatpush2.msra.mxu0 0.0
    %645 = vmatprep.subr.mxu0 0.0
    %646 = vmatpush2.msra.mxu0 0.0
    %647 = vmatprep.subr.mxu0 0.0
    %648 = vmatpush2.msra.mxu0 0.0
    %649 = vmatprep.subr.mxu0 0.0
    %650 = vmatpush2.msra.mxu0 0.0
    %651 = vmatprep.subr.mxu0 0.0
    %652 = vmatpush2.msra.mxu0 0.0
    %653 = vmatprep.subr.mxu0 0.0
    %654 = vmatpush2.msra.mxu0 0.0
    %655 = vmatprep.subr.mxu0 0.0
    %656 = vmatpush2.msra.mxu0 0.0
    %657 = vmatprep.subr.mxu0 0.0
    %658 = vmatpush2.msra.mxu0 0.0
    %659 = vmatprep.subr.mxu0 0.0
    %660 = vmatpush2.msra.mxu0 0.0
    %661 = vmatprep.mubr.f32.mxu0 0.0
    %662 = vmatmul.mubr.f32.gmra.mxu0 %v595
    %v663 = vpop.f32.mrf.mxu0
    %v664 = vadd.f32 0.0, %v663
    %v665 = vpop.f32.mrf.mxu0
    %666 = vdwg.mxu0
    %v667 = vmax.f32 %v592, %v664
    %v669 = vrot.slane %v667, 6
    %v671 = vrot.slane %v667, 2
    %v673 = vsel %vm343, 0.0, %v669
    %v674 = vsel %vm347, %v673, 0.0
    %v675 = vsel %vm343, 0.0, %v671
    %v676 = vsel %vm347, %v675, 0.0
    %v678 = vrot.slane %v676, 4
    %v680 = vsel %vm58, %v674, %v678
    %v682 = vrot.slane %v674, 1
    %v684 = vrot.slane %v676, 5
    %v686 = vsel %vm58, %v682, %v684
    %v687 = vrot.slane %v674, 2
    %v689 = vrot.slane %v676, 6
    %v691 = vsel %vm58, %v687, %v689
    %v692 = vrot.slane %v674, 3
    %v694 = vrot.slane %v676, 7
    %v696 = vsel %vm58, %v692, %v694
    %v697 = vrot.slane %v674, 4
    %v699 = vsel %vm58, %v697, %v676
    %701 = vrot.lane.b32.xlu0 %v686, 16
    %v702 = vpop.permute.xlu0 %701
    %705 = vrot.lane.b32.xlu0 %v691, 32
    %v706 = vpop.permute.xlu0 %705
    %709 = vrot.lane.b32.xlu0 %v696, 48
    %v710 = vpop.permute.xlu0 %709
    %713 = vrot.lane.b32.xlu0 %v699, 64
    %v714 = vpop.permute.xlu0 %713
    %v716 = vsel %vm408, %v680, %v702
    %v717 = vsel %vm172, %v716, %v706
    %vm718 = vcmask 392192
    %v719 = vsel %vm718, %v717, %v710
    %vm720 = vcmask 523264
    %v721 = vsel %vm720, %v719, %v714
    %v722 = vlaneseq
    %v723 = vshrl.u32 %v722, 7
    %v724 = vsub.s32 2, %v723
    %v725 = vrot.slane %v40, %v724
    %731 = vrot.lane.b32.xlu0 %v30, 104
    %v732 = vpop.permute.xlu0 %731
    %733 = vrot.lane.b32.xlu0 %v31, 104
    %v734 = vpop.permute.xlu0 %733
    %735 = vrot.lane.b32.xlu0 %v32, 104
    %v736 = vpop.permute.xlu0 %735
    %737 = vrot.lane.b32.xlu0 %v33, 104
    %v738 = vpop.permute.xlu0 %737
    %739 = vrot.lane.b32.xlu0 %v34, 104
    %v740 = vpop.permute.xlu0 %739
    %741 = vrot.lane.b32.xlu0 %v35, 104
    %v742 = vpop.permute.xlu0 %741
    %743 = vrot.lane.b32.xlu0 %v36, 104
    %v744 = vpop.permute.xlu0 %743
    %745 = vrot.lane.b32.xlu0 %v37, 104
    %v746 = vpop.permute.xlu0 %745
    %747 = vrot.lane.b32.xlu0 %v38, 104
    %v748 = vpop.permute.xlu0 %747
    %749 = vrot.lane.b32.xlu0 %v39, 104
    %v750 = vpop.permute.xlu0 %749
    %vm761 = vcmask 654336
    %v763 = vsel %vm761, %v721, 0
    %765 = vmatprep.subr.mxu0 0.0
    %766 = vmatpush1.msra.mxu0 0.0
    %767 = vmatprep.subr.mxu0 0.0
    %768 = vmatpush1.msra.mxu0 0.0
    %769 = vmatprep.subr.mxu0 0.0
    %770 = vmatpush1.msra.mxu0 0.0
    %771 = vmatprep.subr.mxu0 0.0
    %772 = vmatpush1.msra.mxu0 0.0
    %773 = vmatprep.subr.mxu0 0.0
    %774 = vmatpush1.msra.mxu0 0.0
    %775 = vmatprep.subr.mxu0 0.0
    %776 = vmatpush1.msra.mxu0 0.0
    %777 = vmatprep.subr.mxu0 0.0
    %778 = vmatpush1.msra.mxu0 %v750
    %779 = vmatprep.subr.mxu0 0.0
    %780 = vmatpush1.msra.mxu0 %v748
    %781 = vmatprep.subr.mxu0 0.0
    %782 = vmatpush1.msra.mxu0 %v746
    %783 = vmatprep.subr.mxu0 0.0
    %784 = vmatpush1.msra.mxu0 %v744
    %785 = vmatprep.subr.mxu0 0.0
    %786 = vmatpush1.msra.mxu0 %v742
    %787 = vmatprep.subr.mxu0 0.0
    %788 = vmatpush1.msra.mxu0 %v740
    %789 = vmatprep.subr.mxu0 0.0
    %790 = vmatpush1.msra.mxu0 %v738
    %791 = vmatprep.subr.mxu0 0.0
    %792 = vmatpush1.msra.mxu0 %v736
    %793 = vmatprep.subr.mxu0 0.0
    %794 = vmatpush1.msra.mxu0 %v734
    %795 = vmatprep.subr.mxu0 0.0
    %796 = vmatpush1.msra.mxu0 %v732
    %797 = vmatprep.subr.mxu0 0.0
    %798 = vmatpush2.msra.mxu0 0.0
    %799 = vmatprep.subr.mxu0 0.0
    %800 = vmatpush2.msra.mxu0 0.0
    %801 = vmatprep.subr.mxu0 0.0
    %802 = vmatpush2.msra.mxu0 0.0
    %803 = vmatprep.subr.mxu0 0.0
    %804 = vmatpush2.msra.mxu0 0.0
    %805 = vmatprep.subr.mxu0 0.0
    %806 = vmatpush2.msra.mxu0 0.0
    %807 = vmatprep.subr.mxu0 0.0
    %808 = vmatpush2.msra.mxu0 0.0
    %809 = vmatprep.subr.mxu0 0.0
    %810 = vmatpush2.msra.mxu0 0.0
    %811 = vmatprep.subr.mxu0 0.0
    %812 = vmatpush2.msra.mxu0 0.0
    %813 = vmatprep.subr.mxu0 0.0
    %814 = vmatpush2.msra.mxu0 0.0
    %815 = vmatprep.subr.mxu0 0.0
    %816 = vmatpush2.msra.mxu0 0.0
    %817 = vmatprep.subr.mxu0 0.0
    %818 = vmatpush2.msra.mxu0 0.0
    %819 = vmatprep.subr.mxu0 0.0
    %820 = vmatpush2.msra.mxu0 0.0
    %821 = vmatprep.subr.mxu0 0.0
    %822 = vmatpush2.msra.mxu0 0.0
    %823 = vmatprep.subr.mxu0 0.0
    %824 = vmatpush2.msra.mxu0 0.0
    %825 = vmatprep.subr.mxu0 0.0
    %826 = vmatpush2.msra.mxu0 0.0
    %827 = vmatprep.subr.mxu0 0.0
    %828 = vmatpush2.msra.mxu0 0.0
    %829 = vmatprep.mubr.f32.mxu0 0.0
    %830 = vmatmul.mubr.f32.gmra.mxu0 %v763
    %v831 = vpop.f32.mrf.mxu0
    %v832 = vadd.f32 %v725, %v831
    %v833 = vpop.f32.mrf.mxu0
    %834 = vdwg.mxu0
    %v835 = vmax.f32 %v832, 0.0
    %v836 = vmul.u32 %v152, 4
    %vm837 = vcmp.ge.s32.totalorder %v155, %v836
    %v838 = vadd.s32 %v152, 1
    %v839 = vmul.u32 %v838, 4
    %vm840 = vcmp.lt.s32.totalorder %v155, %v839
    %vm841 = vmand %vm837, %vm840
    %v842 = vsel %vm841, 1, 0
    %v843 = vcvt.s32.f32 %v842
    %v845 = vsel %vm405, %v843, 0
    %847 = vmatprep.subr.mxu0 0.0
    %848 = vmatpush1.msra.mxu0 0.0
    %849 = vmatprep.subr.mxu0 0.0
    %850 = vmatpush1.msra.mxu0 0.0
    %851 = vmatprep.subr.mxu0 0.0
    %852 = vmatpush1.msra.mxu0 0.0
    %853 = vmatprep.subr.mxu0 0.0
    %854 = vmatpush1.msra.mxu0 0.0
    %855 = vmatprep.subr.mxu0 0.0
    %856 = vmatpush1.msra.mxu0 0.0
    %857 = vmatprep.subr.mxu0 0.0
    %858 = vmatpush1.msra.mxu0 0.0
    %859 = vmatprep.subr.mxu0 0.0
    %860 = vmatpush1.msra.mxu0 0.0
    %861 = vmatprep.subr.mxu0 0.0
    %862 = vmatpush1.msra.mxu0 0.0
    %863 = vmatprep.subr.mxu0 0.0
    %864 = vmatpush1.msra.mxu0 0.0
    %865 = vmatprep.subr.mxu0 0.0
    %866 = vmatpush1.msra.mxu0 0.0
    %867 = vmatprep.subr.mxu0 0.0
    %868 = vmatpush1.msra.mxu0 0.0
    %869 = vmatprep.subr.mxu0 0.0
    %870 = vmatpush1.msra.mxu0 0.0
    %871 = vmatprep.subr.mxu0 0.0
    %872 = vmatpush1.msra.mxu0 0.0
    %873 = vmatprep.subr.mxu0 0.0
    %874 = vmatpush1.msra.mxu0 0.0
    %875 = vmatprep.subr.mxu0 0.0
    %876 = vmatpush1.msra.mxu0 0.0
    %877 = vmatprep.subr.mxu0 0.0
    %878 = vmatpush1.msra.mxu0 %v835
    %879 = vmatprep.subr.mxu0 0.0
    %880 = vmatpush2.msra.mxu0 0.0
    %881 = vmatprep.subr.mxu0 0.0
    %882 = vmatpush2.msra.mxu0 0.0
    %883 = vmatprep.subr.mxu0 0.0
    %884 = vmatpush2.msra.mxu0 0.0
    %885 = vmatprep.subr.mxu0 0.0
    %886 = vmatpush2.msra.mxu0 0.0
    %887 = vmatprep.subr.mxu0 0.0
    %888 = vmatpush2.msra.mxu0 0.0
    %889 = vmatprep.subr.mxu0 0.0
    %890 = vmatpush2.msra.mxu0 0.0
    %891 = vmatprep.subr.mxu0 0.0
    %892 = vmatpush2.msra.mxu0 0.0
    %893 = vmatprep.subr.mxu0 0.0
    %894 = vmatpush2.msra.mxu0 0.0
    %895 = vmatprep.subr.mxu0 0.0
    %896 = vmatpush2.msra.mxu0 0.0
    %897 = vmatprep.subr.mxu0 0.0
    %898 = vmatpush2.msra.mxu0 0.0
    %899 = vmatprep.subr.mxu0 0.0
    %900 = vmatpush2.msra.mxu0 0.0
    %901 = vmatprep.subr.mxu0 0.0
    %902 = vmatpush2.msra.mxu0 0.0
    %903 = vmatprep.subr.mxu0 0.0
    %904 = vmatpush2.msra.mxu0 0.0
    %905 = vmatprep.subr.mxu0 0.0
    %906 = vmatpush2.msra.mxu0 0.0
    %907 = vmatprep.subr.mxu0 0.0
    %908 = vmatpush2.msra.mxu0 0.0
    %909 = vmatprep.subr.mxu0 0.0
    %910 = vmatpush2.msra.mxu0 0.0
    %911 = vmatprep.mubr.f32.mxu0 0.0
    %912 = vmatmul.mubr.f32.gmra.mxu0 %v845
    %v913 = vpop.f32.mrf.mxu0
    %v914 = vadd.f32 0.0, %v913
    %v915 = vpop.f32.mrf.mxu0
    %916 = vdwg.mxu0
    %v917 = vmul.f32 %v914, 0.25
    %v918 = vmul.u32 %v152, 16
    %vm919 = vcmp.ge.s32.totalorder %v155, %v918
    %v920 = vmul.u32 %v838, 16
    %vm921 = vcmp.lt.s32.totalorder %v155, %v920
    %vm922 = vmand %vm919, %vm921
    %v923 = vsel %vm922, 1, 0
    %v924 = vcvt.s32.f32 %v923
    %925 = vrot.lane.b32.xlu0 %v26, 120
    %v926 = vpop.permute.xlu0 %925
    %927 = vrot.lane.b32.xlu0 %v27, 120
    %v928 = vpop.permute.xlu0 %927
    %929 = vrot.lane.b32.xlu0 %v28, 120
    %v930 = vpop.permute.xlu0 %929
    %931 = vrot.lane.b32.xlu0 %v29, 120
    %v932 = vpop.permute.xlu0 %931
    %v938 = vsel %vm172, %v924, 0
    %940 = vmatprep.subr.mxu0 0.0
    %941 = vmatpush1.msra.mxu0 0.0
    %942 = vmatprep.subr.mxu0 0.0
    %943 = vmatpush1.msra.mxu0 0.0
    %944 = vmatprep.subr.mxu0 0.0
    %945 = vmatpush1.msra.mxu0 0.0
    %946 = vmatprep.subr.mxu0 0.0
    %947 = vmatpush1.msra.mxu0 0.0
    %948 = vmatprep.subr.mxu0 0.0
    %949 = vmatpush1.msra.mxu0 0.0
    %950 = vmatprep.subr.mxu0 0.0
    %951 = vmatpush1.msra.mxu0 0.0
    %952 = vmatprep.subr.mxu0 0.0
    %953 = vmatpush1.msra.mxu0 0.0
    %954 = vmatprep.subr.mxu0 0.0
    %955 = vmatpush1.msra.mxu0 0.0
    %956 = vmatprep.subr.mxu0 0.0
    %957 = vmatpush1.msra.mxu0 0.0
    %958 = vmatprep.subr.mxu0 0.0
    %959 = vmatpush1.msra.mxu0 0.0
    %960 = vmatprep.subr.mxu0 0.0
    %961 = vmatpush1.msra.mxu0 0.0
    %962 = vmatprep.subr.mxu0 0.0
    %963 = vmatpush1.msra.mxu0 0.0
    %964 = vmatprep.subr.mxu0 0.0
    %965 = vmatpush1.msra.mxu0 %v932
    %966 = vmatprep.subr.mxu0 0.0
    %967 = vmatpush1.msra.mxu0 %v930
    %968 = vmatprep.subr.mxu0 0.0
    %969 = vmatpush1.msra.mxu0 %v928
    %970 = vmatprep.subr.mxu0 0.0
    %971 = vmatpush1.msra.mxu0 %v926
    %972 = vmatprep.subr.mxu0 0.0
    %973 = vmatpush2.msra.mxu0 0.0
    %974 = vmatprep.subr.mxu0 0.0
    %975 = vmatpush2.msra.mxu0 0.0
    %976 = vmatprep.subr.mxu0 0.0
    %977 = vmatpush2.msra.mxu0 0.0
    %978 = vmatprep.subr.mxu0 0.0
    %979 = vmatpush2.msra.mxu0 0.0
    %980 = vmatprep.subr.mxu0 0.0
    %981 = vmatpush2.msra.mxu0 0.0
    %982 = vmatprep.subr.mxu0 0.0
    %983 = vmatpush2.msra.mxu0 0.0
    %984 = vmatprep.subr.mxu0 0.0
    %985 = vmatpush2.msra.mxu0 0.0
    %986 = vmatprep.subr.mxu0 0.0
    %987 = vmatpush2.msra.mxu0 0.0
    %988 = vmatprep.subr.mxu0 0.0
    %989 = vmatpush2.msra.mxu0 0.0
    %990 = vmatprep.subr.mxu0 0.0
    %991 = vmatpush2.msra.mxu0 0.0
    %992 = vmatprep.subr.mxu0 0.0
    %993 = vmatpush2.msra.mxu0 0.0
    %994 = vmatprep.subr.mxu0 0.0
    %995 = vmatpush2.msra.mxu0 0.0
    %996 = vmatprep.subr.mxu0 0.0
    %997 = vmatpush2.msra.mxu0 0.0
    %998 = vmatprep.subr.mxu0 0.0
    %999 = vmatpush2.msra.mxu0 0.0
    %1000 = vmatprep.subr.mxu0 0.0
    %1001 = vmatpush2.msra.mxu0 0.0
    %1002 = vmatprep.subr.mxu0 0.0
    %1003 = vmatpush2.msra.mxu0 0.0
    %1004 = vmatprep.mubr.f32.mxu0 0.0
    %1005 = vmatmul.mubr.f32.gmra.mxu0 %v938
    %v1006 = vpop.f32.mrf.mxu0
    %v1007 = vadd.f32 0.0, %v1006
    %v1008 = vpop.f32.mrf.mxu0
    %1009 = vdwg.mxu0
    %v1010 = vmul.f32 %v1007, 0.0625
    %v1011 = vlaneseq
    %v1012 = vshrl.u32 %v1011, 7
    %v1013 = vsub.s32 3, %v1012
    %v1014 = vrot.slane %v40, %v1013
    %1015 = vrot.lane.b32.xlu0 %v30, 72
    %v1016 = vpop.permute.xlu0 %1015
    %vm1017 = vcmask 31744
    %v1019 = vsel %vm1017, %v1010, 0
    %v1021 = vsel %vm58, %v1016, 0
    %1023 = vmatprep.subr.mxu0 0.0
    %1024 = vmatpush1.msra.mxu0 0.0
    %1025 = vmatprep.subr.mxu0 0.0
    %1026 = vmatpush1.msra.mxu0 0.0
    %1027 = vmatprep.subr.mxu0 0.0
    %1028 = vmatpush1.msra.mxu0 0.0
    %1029 = vmatprep.subr.mxu0 0.0
    %1030 = vmatpush1.msra.mxu0 0.0
    %1031 = vmatprep.subr.mxu0 0.0
    %1032 = vmatpush1.msra.mxu0 0.0
    %1033 = vmatprep.subr.mxu0 0.0
    %1034 = vmatpush1.msra.mxu0 0.0
    %1035 = vmatprep.subr.mxu0 0.0
    %1036 = vmatpush1.msra.mxu0 0.0
    %1037 = vmatprep.subr.mxu0 0.0
    %1038 = vmatpush1.msra.mxu0 0.0
    %1039 = vmatprep.subr.mxu0 0.0
    %1040 = vmatpush1.msra.mxu0 0.0
    %1041 = vmatprep.subr.mxu0 0.0
    %1042 = vmatpush1.msra.mxu0 0.0
    %1043 = vmatprep.subr.mxu0 0.0
    %1044 = vmatpush1.msra.mxu0 0.0
    %1045 = vmatprep.subr.mxu0 0.0
    %1046 = vmatpush1.msra.mxu0 0.0
    %1047 = vmatprep.subr.mxu0 0.0
    %1048 = vmatpush1.msra.mxu0 0.0
    %1049 = vmatprep.subr.mxu0 0.0
    %1050 = vmatpush1.msra.mxu0 0.0
    %1051 = vmatprep.subr.mxu0 0.0
    %1052 = vmatpush1.msra.mxu0 0.0
    %1053 = vmatprep.subr.mxu0 0.0
    %1054 = vmatpush1.msra.mxu0 %v1021
    %1055 = vmatprep.subr.mxu0 0.0
    %1056 = vmatpush2.msra.mxu0 0.0
    %1057 = vmatprep.subr.mxu0 0.0
    %1058 = vmatpush2.msra.mxu0 0.0
    %1059 = vmatprep.subr.mxu0 0.0
    %1060 = vmatpush2.msra.mxu0 0.0
    %1061 = vmatprep.subr.mxu0 0.0
    %1062 = vmatpush2.msra.mxu0 0.0
    %1063 = vmatprep.subr.mxu0 0.0
    %1064 = vmatpush2.msra.mxu0 0.0
    %1065 = vmatprep.subr.mxu0 0.0
    %1066 = vmatpush2.msra.mxu0 0.0
    %1067 = vmatprep.subr.mxu0 0.0
    %1068 = vmatpush2.msra.mxu0 0.0
    %1069 = vmatprep.subr.mxu0 0.0
    %1070 = vmatpush2.msra.mxu0 0.0
    %1071 = vmatprep.subr.mxu0 0.0
    %1072 = vmatpush2.msra.mxu0 0.0
    %1073 = vmatprep.subr.mxu0 0.0
    %1074 = vmatpush2.msra.mxu0 0.0
    %1075 = vmatprep.subr.mxu0 0.0
    %1076 = vmatpush2.msra.mxu0 0.0
    %1077 = vmatprep.subr.mxu0 0.0
    %1078 = vmatpush2.msra.mxu0 0.0
    %1079 = vmatprep.subr.mxu0 0.0
    %1080 = vmatpush2.msra.mxu0 0.0
    %1081 = vmatprep.subr.mxu0 0.0
    %1082 = vmatpush2.msra.mxu0 0.0
    %1083 = vmatprep.subr.mxu0 0.0
    %1084 = vmatpush2.msra.mxu0 0.0
    %1085 = vmatprep.subr.mxu0 0.0
    %1086 = vmatpush2.msra.mxu0 0.0
    %1087 = vmatprep.mubr.f32.mxu0 0.0
    %1088 = vmatmul.mubr.f32.gmra.mxu0 %v1019
    %v1089 = vpop.f32.mrf.mxu0
    %v1090 = vadd.f32 %v1014, %v1089
    %v1091 = vpop.f32.mrf.mxu0
    %1092 = vdwg.mxu0
    %v1093 = vadd.f32 %v917, %v1090
    %v1094 = vlaneseq
    %v1095 = vshrl.u32 %v1094, 7
    %v1096 = vsub.s32 4, %v1095
    %v1097 = vrot.slane %v40, %v1096
    %1098 = vrot.lane.b32.xlu0 %v30, 40
    %v1099 = vpop.permute.xlu0 %1098
    %1100 = vrot.lane.b32.xlu0 %v31, 40
    %v1101 = vpop.permute.xlu0 %1100
    %1102 = vrot.lane.b32.xlu0 %v32, 40
    %v1103 = vpop.permute.xlu0 %1102
    %1104 = vrot.lane.b32.xlu0 %v33, 40
    %v1105 = vpop.permute.xlu0 %1104
    %v1111 = vsel %vm172, %v1093, 0
    %1113 = vmatprep.subr.mxu0 0.0
    %1114 = vmatpush1.msra.mxu0 0.0
    %1115 = vmatprep.subr.mxu0 0.0
    %1116 = vmatpush1.msra.mxu0 0.0
    %1117 = vmatprep.subr.mxu0 0.0
    %1118 = vmatpush1.msra.mxu0 0.0
    %1119 = vmatprep.subr.mxu0 0.0
    %1120 = vmatpush1.msra.mxu0 0.0
    %1121 = vmatprep.subr.mxu0 0.0
    %1122 = vmatpush1.msra.mxu0 0.0
    %1123 = vmatprep.subr.mxu0 0.0
    %1124 = vmatpush1.msra.mxu0 0.0
    %1125 = vmatprep.subr.mxu0 0.0
    %1126 = vmatpush1.msra.mxu0 0.0
    %1127 = vmatprep.subr.mxu0 0.0
    %1128 = vmatpush1.msra.mxu0 0.0
    %1129 = vmatprep.subr.mxu0 0.0
    %1130 = vmatpush1.msra.mxu0 0.0
    %1131 = vmatprep.subr.mxu0 0.0
    %1132 = vmatpush1.msra.mxu0 0.0
    %1133 = vmatprep.subr.mxu0 0.0
    %1134 = vmatpush1.msra.mxu0 0.0
    %1135 = vmatprep.subr.mxu0 0.0
    %1136 = vmatpush1.msra.mxu0 0.0
    %1137 = vmatprep.subr.mxu0 0.0
    %1138 = vmatpush1.msra.mxu0 %v1105
    %1139 = vmatprep.subr.mxu0 0.0
    %1140 = vmatpush1.msra.mxu0 %v1103
    %1141 = vmatprep.subr.mxu0 0.0
    %1142 = vmatpush1.msra.mxu0 %v1101
    %1143 = vmatprep.subr.mxu0 0.0
    %1144 = vmatpush1.msra.mxu0 %v1099
    %1145 = vmatprep.subr.mxu0 0.0
    %1146 = vmatpush2.msra.mxu0 0.0
    %1147 = vmatprep.subr.mxu0 0.0
    %1148 = vmatpush2.msra.mxu0 0.0
    %1149 = vmatprep.subr.mxu0 0.0
    %1150 = vmatpush2.msra.mxu0 0.0
    %1151 = vmatprep.subr.mxu0 0.0
    %1152 = vmatpush2.msra.mxu0 0.0
    %1153 = vmatprep.subr.mxu0 0.0
    %1154 = vmatpush2.msra.mxu0 0.0
    %1155 = vmatprep.subr.mxu0 0.0
    %1156 = vmatpush2.msra.mxu0 0.0
    %1157 = vmatprep.subr.mxu0 0.0
    %1158 = vmatpush2.msra.mxu0 0.0
    %1159 = vmatprep.subr.mxu0 0.0
    %1160 = vmatpush2.msra.mxu0 0.0
    %1161 = vmatprep.subr.mxu0 0.0
    %1162 = vmatpush2.msra.mxu0 0.0
    %1163 = vmatprep.subr.mxu0 0.0
    %1164 = vmatpush2.msra.mxu0 0.0
    %1165 = vmatprep.subr.mxu0 0.0
    %1166 = vmatpush2.msra.mxu0 0.0
    %1167 = vmatprep.subr.mxu0 0.0
    %1168 = vmatpush2.msra.mxu0 0.0
    %1169 = vmatprep.subr.mxu0 0.0
    %1170 = vmatpush2.msra.mxu0 0.0
    %1171 = vmatprep.subr.mxu0 0.0
    %1172 = vmatpush2.msra.mxu0 0.0
    %1173 = vmatprep.subr.mxu0 0.0
    %1174 = vmatpush2.msra.mxu0 0.0
    %1175 = vmatprep.subr.mxu0 0.0
    %1176 = vmatpush2.msra.mxu0 0.0
    %1177 = vmatprep.mubr.f32.mxu0 0.0
    %1178 = vmatmul.mubr.f32.gmra.mxu0 %v1111
    %v1179 = vpop.f32.mrf.mxu0
    %v1180 = vadd.f32 %v1097, %v1179
    %v1181 = vpop.f32.mrf.mxu0
    %1182 = vdwg.mxu0
    %vm1183 = vcmask 17408
    %1184 = vst.msk [vmem:[#allocation5] sm:$0x3] %vm1183, %v1180
    // Predicated region
    $region14: #{tpu_custom_call.1} parent=1 // pred_check
      _
    $region15: #{tpu_custom_call.1} parent=1 // pred_check_branch
      %1186 = sbr.rel (0) target = $region17
    $region16: #{tpu_custom_call.1} parent=1 // pred_region
      %s1188 = ssub.s32 32, 32
      %1189 = vsyncadd [#allocation4], %s1188
      %s1191 = sshll.u32 [#allocation5], 4
      %s1192 = int_to_ptr.vmem [resolvable:$true] %s1191
      %1194 = dma.vmem_to_hbm [thread:$0]  %s1192, 32, %s2, [#allocation4]
    $region17: #{tpu_custom_call.1} parent=1 // pred_fallthru
      _
    // Predicated region
    $region18: #{tpu_custom_call.1} parent=1 // pred_check
      _
    $region19: #{tpu_custom_call.1} parent=1 // pred_check_branch
      %1196 = sbr.rel (0) target = $region21
    $region20: #{tpu_custom_call.1} parent=1 // pred_region
      %1197 = dma.done [#allocation4], 32
    $region21: #{tpu_custom_call.1} parent=1 // pred_fallthru
      _
    %1198 = vsyncpa [#allocation3], 1
    %1199 = vsyncpa [#allocation4], 1

</llo_original>
